<compile_context>
chip_gen: v7x
topology: tpu7x:2x2x1
jax: 0.10.0
libtpu: 0.0.40
codegen_flags: <defaults>
</compile_context>

<pallas_src>
import functools

import jax
import jax.numpy as jnp
from jax import lax
from jax.experimental import pallas as pl
from jax.experimental.pallas import tpu as pltpu


def _elastic_arcface_kernel(hit_map_ref, emb_ref, w_ref, s_inv_wn_ref,
                            label_ref, s_cosm_ref, s_sinm_ref, out_ref,
                            *, s, tile_c, dot_dtype):
    i = pl.program_id(0)
    j = pl.program_id(1)

    emb = emb_ref[...]                                        # [tile_B, D] f32
    # Per-row inverse L2 norm: EUP rsqrt, no divides, no normalized copy.
    inv_en = lax.rsqrt(jnp.sum(emb * emb, axis=1, keepdims=True) + 1e-12)

    # MXU matmul on raw operands (bf16 feeds the MXU at full rate when
    # dot_dtype=bfloat16); normalization is applied to the f32 result.
    dot = jnp.dot(emb.astype(dot_dtype), w_ref[...].astype(dot_dtype),
                  preferred_element_type=jnp.float32)         # [tile_B, tile_C]

    # s_inv_wn == s / ||w_col||, so `base` is s * clip(cos_theta, -1, 1).
    base = jnp.clip(dot * inv_en * s_inv_wn_ref[...], -s, s)

    # Margin epilogue only for tiles whose column range contains a label.
    @pl.when(hit_map_ref[i, j] > 0)
    def _():
        label = label_ref[...]                                # [tile_B, 1] i32
        col = j * tile_c + lax.broadcasted_iota(jnp.int32, base.shape, 1)
        hit = (col == label) & (label != -1)
        cos_theta = base * (1.0 / s)
        sin_theta = jnp.sqrt(jnp.maximum(1.0 - cos_theta * cos_theta, 0.0))
        # s*cos(theta + m) = cos_theta * (s*cos m) - sin_theta * (s*sin m)
        with_margin = cos_theta * s_cosm_ref[...] - sin_theta * s_sinm_ref[...]
        out_ref[...] = jnp.where(hit, with_margin, base)

    @pl.when(hit_map_ref[i, j] == 0)
    def _():
        out_ref[...] = base


def _vmem_limit_bytes(tile_b, tile_c, d):
    # Rough double-buffered footprint (+ headroom), clamped so it stays safely
    # inside the smallest-VMEM generation (v7x: 64 MiB physical).
    per_step = 4 * (tile_b * d + d * tile_c + tile_c + 3 * tile_b
                    + tile_b * tile_c)
    est = 2 * per_step + (4 << 20)
    return int(min(max(est, 16 << 20), 48 << 20))


def elastic_arcface_forward(embeddings, weight, label, margin, *, s=64.0,
                            tile_b=256, tile_c=512, dot_dtype=jnp.float32):
    """Pallas ElasticArcFace forward (plus=False path).

    embeddings: [B, in_features] float32
    weight:     [in_features, out_features] float32 (the module's `kernel`)
    label:      [B] int32, -1 means "no margin applied for this row"
    margin:     [B] float32, pre-sampled per-row additive angular margins
    """
    B, D = embeddings.shape
    D2, C = weight.shape
    assert D == D2

    tile_b = int(min(tile_b, B))
    tile_c = int(min(tile_c, C))
    num_b = pl.cdiv(B, tile_b)
    num_c = pl.cdiv(C, tile_c)

    emb32 = embeddings.astype(jnp.float32)
    w32 = weight.astype(jnp.float32)
    label = label.astype(jnp.int32)

    # Column scale (1/||w[:,c]||) precomputed once, folded with s.
    s_inv_wn = (jnp.float32(s)
                * lax.rsqrt(jnp.sum(w32 * w32, axis=0, keepdims=True) + 1e-12))

    label2d = label.reshape(B, 1)
    s_cos_m = (s * jnp.cos(margin)).reshape(B, 1).astype(jnp.float32)
    s_sin_m = (s * jnp.sin(margin)).reshape(B, 1).astype(jnp.float32)

    # Per-(B-tile, C-tile) "does any row's label fall in this column tile"
    # map, scalar-prefetched into SMEM so no-hit tiles skip the epilogue.
    pad_b = num_b * tile_b
    lab_pad = jnp.full((pad_b,), -1, jnp.int32).at[:B].set(label)
    row_tile = jnp.arange(pad_b, dtype=jnp.int32) // tile_b
    col_tile = jnp.clip(lab_pad, 0, C - 1) // tile_c
    hit_map = jnp.zeros((num_b, num_c), jnp.int32).at[row_tile, col_tile].add(
        (lab_pad >= 0).astype(jnp.int32))

    kernel = functools.partial(_elastic_arcface_kernel, s=float(s),
                               tile_c=tile_c, dot_dtype=dot_dtype)

    grid_spec = pltpu.PrefetchScalarGridSpec(
        num_scalar_prefetch=1,
        grid=(num_b, num_c),
        in_specs=[
            pl.BlockSpec((tile_b, D), lambda i, j, hm: (i, 0)),   # embeddings
            pl.BlockSpec((D, tile_c), lambda i, j, hm: (0, j)),   # weight
            pl.BlockSpec((1, tile_c), lambda i, j, hm: (0, j)),   # s/||w_col||
            pl.BlockSpec((tile_b, 1), lambda i, j, hm: (i, 0)),   # label
            pl.BlockSpec((tile_b, 1), lambda i, j, hm: (i, 0)),   # s*cos(m)
            pl.BlockSpec((tile_b, 1), lambda i, j, hm: (i, 0)),   # s*sin(m)
        ],
        out_specs=pl.BlockSpec((tile_b, tile_c), lambda i, j, hm: (i, j)),
    )

    return pl.pallas_call(
        kernel,
        out_shape=jax.ShapeDtypeStruct((B, C), jnp.float32),
        grid_spec=grid_spec,
        compiler_params=pltpu.CompilerParams(
            dimension_semantics=("parallel", "parallel"),
            vmem_limit_bytes=_vmem_limit_bytes(tile_b, tile_c, D)),
    )(hit_map, emb32, w32, s_inv_wn, label2d, s_cos_m, s_sin_m)


def _reference(embeddings, weight, label, margin, s=64.0):
    """Pure-JAX reference mirroring the PyTorch forward (plus=False)."""
    emb_n = embeddings / jnp.linalg.norm(embeddings, axis=1, keepdims=True)
    w_n = weight / jnp.linalg.norm(weight, axis=0, keepdims=True)
    cos_theta = jnp.clip(emb_n @ w_n, -1.0, 1.0)
    theta = jnp.arccos(cos_theta)
    col = jnp.arange(cos_theta.shape[1])[None, :]
    hit = (col == label[:, None]) & (label[:, None] != -1)
    m_hot = jnp.where(hit, margin[:, None], 0.0)
    return jnp.cos(theta + m_hot) * s


if __name__ == "__main__":
    # Small deterministic shapes, but big enough to exercise a real 2x4 grid.
    B, IN_FEATURES, OUT_FEATURES = 16, 64, 1024
    TILE_B, TILE_C = 8, 256
    S, M, STD = 64.0, 0.5, 0.0125

    key = jax.random.PRNGKey(0)
    k_emb, k_w, k_lab, k_m = jax.random.split(key, 4)

    embeddings = jax.random.normal(k_emb, (B, IN_FEATURES), dtype=jnp.float32)
    # nn.init.normal_(self.kernel, std=0.01), shape (in_features, out_features)
    weight = 0.01 * jax.random.normal(k_w, (IN_FEATURES, OUT_FEATURES),
                                      dtype=jnp.float32)
    label = jax.random.randint(k_lab, (B,), 0, OUT_FEATURES, dtype=jnp.int32)
    label = label.at[3].set(-1)    # exercise the "label == -1" masking path
    label = label.at[10].set(-1)
    # torch.normal(mean=m, std=std) margins, sampled deterministically.
    margin = M + STD * jax.random.normal(k_m, (B,), dtype=jnp.float32)

    ref = _reference(embeddings, weight, label, margin, s=S)

    # f32 MXU path: matches the f32 reference tightly.
    out = elastic_arcface_forward(embeddings, weight, label, margin, s=S,
                                  tile_b=TILE_B, tile_c=TILE_C,
                                  dot_dtype=jnp.float32)
    out = jax.block_until_ready(out)
    assert out.shape == (B, OUT_FEATURES)
    assert jnp.allclose(out, ref, atol=2e-3, rtol=1e-4), "f32 mismatch vs ref"

    # bf16 MXU path (full-rate MXU on v5e/v6e/v7x).  Looser tolerance: bf16
    # operand quantization bounds the cos error by ~2^-8, i.e. ~0.25 after *s.
    out_bf16 = elastic_arcface_forward(embeddings, weight, label, margin, s=S,
                                       tile_b=TILE_B, tile_c=TILE_C,
                                       dot_dtype=jnp.bfloat16)
    out_bf16 = jax.block_until_ready(out_bf16)
    assert jnp.allclose(out_bf16, ref, atol=0.5), "bf16 mismatch vs ref"

    print("KERNEL_OK")
</pallas_src>

<mosaic_0001>
module attributes {stable_mosaic.version = 11 : i64} {
  func.func @_elastic_arcface_kernel(%arg0: i32, %arg1: i32, %arg2: memref<2x4xi32, #tpu.memory_space<smem>>, %arg3: memref<8x64xf32, #tpu.memory_space<vmem>>, %arg4: memref<64x256xf32, #tpu.memory_space<vmem>>, %arg5: memref<1x256xf32, #tpu.memory_space<vmem>>, %arg6: memref<8x1xi32, #tpu.memory_space<vmem>>, %arg7: memref<8x1xf32, #tpu.memory_space<vmem>>, %arg8: memref<8x1xf32, #tpu.memory_space<vmem>>, %arg9: memref<8x256xf32, #tpu.memory_space<vmem>>) attributes {dimension_semantics = [#tpu.dimension_semantics<parallel>, #tpu.dimension_semantics<parallel>], iteration_bounds = array<i64: 2, 4>, scalar_prefetch = 1 : i64, scratch_operands = 0 : i64, tpu.core_type = #tpu.core_type<tc>, window_params = [{transform_indices = @transform_0, window_bounds = array<i64: 8, 64>}, {transform_indices = @transform_1, window_bounds = array<i64: 64, 256>}, {transform_indices = @transform_2, window_bounds = array<i64: 1, 256>}, {transform_indices = @transform_3, window_bounds = array<i64: 8, 1>}, {transform_indices = @transform_4, window_bounds = array<i64: 8, 1>}, {transform_indices = @transform_5, window_bounds = array<i64: 8, 1>}, {transform_indices = @transform_6, window_bounds = array<i64: 8, 256>}]} {
    %c0 = arith.constant 0 : index
    %c0_0 = arith.constant 0 : index
    %0 = vector.load %arg3[%c0, %c0_0] : memref<8x64xf32, #tpu.memory_space<vmem>>, vector<8x64xf32>
    %1 = arith.mulf %0, %0 : vector<8x64xf32>
    %cst = arith.constant dense<0.000000e+00> : vector<8xf32>
    %2 = vector.multi_reduction <add>, %1, %cst [1] : vector<8x64xf32> to vector<8xf32>
    %3 = vector.shape_cast %2 : vector<8xf32> to vector<8x1xf32>
    %cst_1 = arith.constant 9.99999996E-13 : f32
    %4 = vector.broadcast %cst_1 : f32 to vector<8x1xf32>
    %5 = arith.addf %3, %4 : vector<8x1xf32>
    %6 = math.rsqrt %5 : vector<8x1xf32>
    %c0_2 = arith.constant 0 : index
    %c0_3 = arith.constant 0 : index
    %7 = vector.load %arg4[%c0_2, %c0_3] : memref<64x256xf32, #tpu.memory_space<vmem>>, vector<64x256xf32>
    %cst_4 = arith.constant dense<0.000000e+00> : vector<8x256xf32>
    %8 = tpu.matmul %0, %7, %cst_4 {dimension_numbers = #tpu.dot_dimension_numbers<[1], [0], [0], [1], [0, 0, 1, 1], [], []>} : vector<8x64xf32>, vector<64x256xf32>, vector<8x256xf32> -> vector<8x256xf32>
    %9 = vector.broadcast %6 : vector<8x1xf32> to vector<8x256xf32>
    %10 = arith.mulf %8, %9 : vector<8x256xf32>
    %c0_5 = arith.constant 0 : index
    %c0_6 = arith.constant 0 : index
    %11 = vector.load %arg5[%c0_5, %c0_6] : memref<1x256xf32, #tpu.memory_space<vmem>>, vector<1x256xf32>
    %12 = vector.broadcast %11 : vector<1x256xf32> to vector<8x256xf32>
    %13 = arith.mulf %10, %12 : vector<8x256xf32>
    %cst_7 = arith.constant -6.400000e+01 : f32
    %cst_8 = arith.constant 6.400000e+01 : f32
    %14 = vector.broadcast %cst_7 : f32 to vector<8x256xf32>
    %15 = arith.maximumf %14, %13 : vector<8x256xf32>
    %16 = vector.broadcast %cst_8 : f32 to vector<8x256xf32>
    %17 = arith.minimumf %16, %15 : vector<8x256xf32>
    %18 = arith.index_cast %arg0 : i32 to index
    %19 = arith.index_cast %arg1 : i32 to index
    %20 = memref.load %arg2[%18, %19] : memref<2x4xi32, #tpu.memory_space<smem>>
    %c0_i32 = arith.constant 0 : i32
    %21 = arith.cmpi sgt, %20, %c0_i32 : i32
    %22 = arith.extui %21 : i1 to i32
    %c0_i32_9 = arith.constant 0 : i32
    %23 = arith.cmpi ne, %22, %c0_i32_9 : i32
    scf.if %23 {
      %c0_12 = arith.constant 0 : index
      %c0_13 = arith.constant 0 : index
      %30 = vector.load %arg6[%c0_12, %c0_13] : memref<8x1xi32, #tpu.memory_space<vmem>>, vector<8x1xi32>
      %c256_i32 = arith.constant 256 : i32
      %31 = arith.muli %arg1, %c256_i32 : i32
      %32 = tpu.iota {dimensions = array<i32: 1>} : vector<8x256xi32>
      %33 = vector.broadcast %31 : i32 to vector<8x256xi32>
      %34 = arith.addi %33, %32 : vector<8x256xi32>
      %35 = vector.broadcast %30 : vector<8x1xi32> to vector<8x256xi32>
      %36 = arith.cmpi eq, %34, %35 : vector<8x256xi32>
      %c-1_i32 = arith.constant -1 : i32
      %37 = vector.broadcast %c-1_i32 : i32 to vector<8x1xi32>
      %38 = arith.cmpi ne, %30, %37 : vector<8x1xi32>
      %39 = vector.broadcast %38 : vector<8x1xi1> to vector<8x256xi1>
      %40 = arith.andi %36, %39 : vector<8x256xi1>
      %cst_14 = arith.constant 1.562500e-02 : f32
      %41 = vector.broadcast %cst_14 : f32 to vector<8x256xf32>
      %42 = arith.mulf %17, %41 : vector<8x256xf32>
      %43 = arith.mulf %42, %42 : vector<8x256xf32>
      %cst_15 = arith.constant 1.000000e+00 : f32
      %44 = vector.broadcast %cst_15 : f32 to vector<8x256xf32>
      %45 = arith.subf %44, %43 : vector<8x256xf32>
      %cst_16 = arith.constant 0.000000e+00 : f32
      %46 = vector.broadcast %cst_16 : f32 to vector<8x256xf32>
      %47 = arith.maximumf %45, %46 : vector<8x256xf32>
      %48 = math.sqrt %47 : vector<8x256xf32>
      %c0_17 = arith.constant 0 : index
      %c0_18 = arith.constant 0 : index
      %49 = vector.load %arg7[%c0_17, %c0_18] : memref<8x1xf32, #tpu.memory_space<vmem>>, vector<8x1xf32>
      %50 = vector.broadcast %49 : vector<8x1xf32> to vector<8x256xf32>
      %51 = arith.mulf %42, %50 : vector<8x256xf32>
      %c0_19 = arith.constant 0 : index
      %c0_20 = arith.constant 0 : index
      %52 = vector.load %arg8[%c0_19, %c0_20] : memref<8x1xf32, #tpu.memory_space<vmem>>, vector<8x1xf32>
      %53 = vector.broadcast %52 : vector<8x1xf32> to vector<8x256xf32>
      %54 = arith.mulf %48, %53 : vector<8x256xf32>
      %55 = arith.subf %51, %54 : vector<8x256xf32>
      %56 = arith.select %40, %55, %17 : vector<8x256xi1>, vector<8x256xf32>
      %c0_21 = arith.constant 0 : index
      %c0_22 = arith.constant 0 : index
      %57 = vector.load %arg9[%c0_21, %c0_22] : memref<8x256xf32, #tpu.memory_space<vmem>>, vector<8x256xf32>
      tpu.vector_store %arg9[%c0_21, %c0_22], %56 {strides = array<i32>} : memref<8x256xf32, #tpu.memory_space<vmem>>, vector<8x256xf32>,
    } else {
    }
    %24 = arith.index_cast %arg0 : i32 to index
    %25 = arith.index_cast %arg1 : i32 to index
    %26 = memref.load %arg2[%24, %25] : memref<2x4xi32, #tpu.memory_space<smem>>
    %c0_i32_10 = arith.constant 0 : i32
    %27 = arith.cmpi eq, %26, %c0_i32_10 : i32
    %28 = arith.extui %27 : i1 to i32
    %c0_i32_11 = arith.constant 0 : i32
    %29 = arith.cmpi ne, %28, %c0_i32_11 : i32
    scf.if %29 {
      %c0_12 = arith.constant 0 : index
      %c0_13 = arith.constant 0 : index
      %30 = vector.load %arg9[%c0_12, %c0_13] : memref<8x256xf32, #tpu.memory_space<vmem>>, vector<8x256xf32>
      tpu.vector_store %arg9[%c0_12, %c0_13], %17 {strides = array<i32>} : memref<8x256xf32, #tpu.memory_space<vmem>>, vector<8x256xf32>,
    } else {
    }
    return
  }
  func.func @transform_0(%arg0: i32, %arg1: i32, %arg2: memref<2x4xi32, #tpu.memory_space<smem>>) -> (i32, i32) {
    %c0_i32 = arith.constant 0 : i32
    %c0_i32_0 = arith.constant 0 : i32
    return %arg0, %c0_i32 : i32, i32
  }
  func.func @transform_1(%arg0: i32, %arg1: i32, %arg2: memref<2x4xi32, #tpu.memory_space<smem>>) -> (i32, i32) {
    %c0_i32 = arith.constant 0 : i32
    %c0_i32_0 = arith.constant 0 : i32
    return %c0_i32, %arg1 : i32, i32
  }
  func.func @transform_2(%arg0: i32, %arg1: i32, %arg2: memref<2x4xi32, #tpu.memory_space<smem>>) -> (i32, i32) {
    %c0_i32 = arith.constant 0 : i32
    %c0_i32_0 = arith.constant 0 : i32
    return %c0_i32, %arg1 : i32, i32
  }
  func.func @transform_3(%arg0: i32, %arg1: i32, %arg2: memref<2x4xi32, #tpu.memory_space<smem>>) -> (i32, i32) {
    %c0_i32 = arith.constant 0 : i32
    %c0_i32_0 = arith.constant 0 : i32
    return %arg0, %c0_i32 : i32, i32
  }
  func.func @transform_4(%arg0: i32, %arg1: i32, %arg2: memref<2x4xi32, #tpu.memory_space<smem>>) -> (i32, i32) {
    %c0_i32 = arith.constant 0 : i32
    %c0_i32_0 = arith.constant 0 : i32
    return %arg0, %c0_i32 : i32, i32
  }
  func.func @transform_5(%arg0: i32, %arg1: i32, %arg2: memref<2x4xi32, #tpu.memory_space<smem>>) -> (i32, i32) {
    %c0_i32 = arith.constant 0 : i32
    %c0_i32_0 = arith.constant 0 : i32
    return %arg0, %c0_i32 : i32, i32
  }
  func.func @transform_6(%arg0: i32, %arg1: i32, %arg2: memref<2x4xi32, #tpu.memory_space<smem>>) -> (i32, i32) {
    %c0_i32 = arith.constant 0 : i32
    return %arg0, %arg1 : i32, i32
  }
}

</mosaic_0001>

<llo_original>
// kernel: tpu_custom_call.1
$region0: #{tpu_custom_call.1}
  #allocation0 [shape = 'u32[]', space=smem, size = 0x4, offset = 0x4, fixed_abs, tag = 'smem constant byte address 0x4 - core index']
  #allocation1 [shape = 'u32[144,128]{1,0:T(1,128)}', space=vmem, size = 0x12000, scoped, tag = 'internal scratch']
  #allocation2 [shape = 's32[1]{0}', space=sflag, size = 0x4, scoped, tag = 'scoped memory for tpu_custom_call.1']
  #allocation3 [shape = 'u8[1024]{0}', space=smem, size = 0x400, scoped, tag = 'prefetched SMEM operand 0']
  %s0 = inlined_call_operand.vmem [shape: s32[2,4], index: 0, kind: input, shape index: {}]
  %s1 = inlined_call_operand.vmem [shape: f32[16,64], index: 1, kind: input, shape index: {}]
  %s2 = inlined_call_operand.hbm [shape: f32[64,1024], index: 2, kind: input, shape index: {}]
  %s3 = inlined_call_operand.vmem [shape: f32[1,1024], index: 3, kind: input, shape index: {}]
  %s4 = inlined_call_operand.vmem [shape: s32[16,1], index: 4, kind: input, shape index: {}]
  %s5 = inlined_call_operand.vmem [shape: f32[16,1], index: 5, kind: input, shape index: {}]
  %s6 = inlined_call_operand.vmem [shape: f32[16,1], index: 6, kind: input, shape index: {}]
  %s7 = inlined_call_operand.hbm [shape: f32[16,1024], index: 7, kind: output, shape index: {}]
  %s8 = sld [smem:[#allocation0]]
  $region69: #{tpu_custom_call.1} parent=0
    _
  %s10 = ssub.s32 1, %s8
  %s11 = scalar_select 0, %s10, %s8
  %s12 = sshll.u32 %s0, 4
  %s13 = int_to_ptr.vmem [resolvable:$true] %s12
  %15 = dma.vmem_to_smem %s13, 32, [#allocation3], [#allocation2]
  %16 = dma.done [#allocation2], 32
  %17 = sfence
  $region1: #{tpu_custom_call.1} parent=0
    #allocation4 [shape = 'u8[131072]{0}', space=vmem, size = 0x20000, scoped, tag = 'input window, operand 2']
    #allocation5 [shape = 's32[2]{0}', space=sflag, size = 0x8, scoped, tag = 'scoped memory for tpu_custom_call.1']
    #allocation6 [shape = 's32[2]{0}', space=sflag, size = 0x8, scoped, tag = 'scoped memory for tpu_custom_call.1']
    #allocation7 [shape = 'u8[16384]{0}', space=vmem, size = 0x4000, scoped, tag = 'output window, operand 0']
    %18 = vsyncpa [#allocation5], 0
    %s19 = scalar_lea.sflag [#allocation5], 1
    %20 = vsyncpa %s19, 0
    %21 = vsyncpa [#allocation6], 0
    %s22 = scalar_lea.sflag [#allocation6], 1
    %23 = vsyncpa %s22, 0
    loop: start=0, step=1, limit=10
    $region2: #{tpu_custom_call.1} parent=1 // loop_pre_header
      _
    $region3: #{tpu_custom_call.1} parent=1 // loop_header
      %s25 = sphi 0, %s29
      %p26 = scmp.ge.s32.totalorder %s25, 10
      %s32 = sphi 0, %s44
      %s33 = sphi 0, %s40
      %s34 = sphi 0, %s32
      %s35 = sphi 0, %s33
      %s36 = sphi 0, %s34
      %s37 = sphi 0, %s35
      %s47 = sphi 0, %s49
      %s50 = sphi 0, %s47
      %s51 = sphi 0, %s50
      %s67 = sphi 0, %s51
      %s73 = sphi 0, %s75
      %s76 = sphi 0, %s73
      %s77 = sphi 0, %s76
      %s93 = sphi 0, %s77
      %s99 = sphi 0, %s101
      %s102 = sphi 0, %s99
      %s103 = sphi 0, %s102
      %s119 = sphi 0, %s103
      %s125 = sphi 0, %s127
      %s128 = sphi 0, %s125
      %s129 = sphi 0, %s128
      %s145 = sphi 0, %s129
      %s151 = sphi 0, %s153
      %s154 = sphi 0, %s151
      %s155 = sphi 0, %s154
      %s171 = sphi 0, %s155
      %s177 = sphi 0, %s179
      %s180 = sphi 0, %s177
      %s181 = sphi 0, %s180
      %s197 = sphi 0, %s181
      %s205 = sphi 0, %s207
      %s208 = sphi 0, %s205
      %s209 = sphi 0, %s208
      %s225 = sphi 0, %s209
    $region4: #{tpu_custom_call.1} parent=1 // loop_header_branch
      %28 = sbr.rel (%p26) target = $region8
    $region5: #{tpu_custom_call.1} parent=1 // loop_body
      %s30 = ssub.s32 %s25, 1
      %s31 = ssub.s32 %s25, 2
      %s38 = sadd.s32 1, %s33
      %p39 = scmp.ge.s32.totalorder %s38, 4
      %s40 = scalar_select %p39, 0, %s38
      %s41 = sadd.s32 1, %s32
      %s42 = scalar_select %p39, %s41, %s32
      %p43 = scmp.ge.s32.totalorder %s42, 2
      %s44 = scalar_select %p43, 0, %s42
      %s45 = ssub.s32 %s32, %s44
      %p46 = scmp.eq.s32.totalorder %s45, 0
      %s48 = sadd.s32 %s47, 1
      %s49 = scalar_select %p46, %s47, %s48
      %p52 = pneg %p46
      %p53 = scmp.eq.s32.totalorder %s25, 7
      %p54 = por %p52, %p53
      %p55 = scmp.ne.s32.totalorder %s47, %s50
      %p56 = scmp.eq.s32.totalorder %s25, 0
      %p57 = por %p55, %p56
      %p58 = scmp.ne.s32.totalorder %s47, %s50
      %p59 = scmp.eq.s32.totalorder %s30, 7
      %p60 = por %p58, %p59
      %p61 = scmp.ne.s32.totalorder %s50, %s51
      %p62 = scmp.eq.s32.totalorder %s30, 0
      %p63 = por %p61, %p62
      %p64 = scmp.ne.s32.totalorder %s50, %s51
      %p65 = scmp.eq.s32.totalorder %s31, 7
      %p66 = por %p64, %p65
      %p68 = scmp.ne.s32.totalorder %s51, %s67
      %p69 = scmp.eq.s32.totalorder %s31, 0
      %p70 = por %p68, %p69
      %s71 = ssub.s32 %s33, %s40
      %p72 = scmp.eq.s32.totalorder %s71, 0
      %s74 = sadd.s32 %s73, 1
      %s75 = scalar_select %p72, %s73, %s74
      %p78 = pneg %p72
      %p79 = scmp.eq.s32.totalorder %s25, 7
      %p80 = por %p78, %p79
      %p81 = scmp.ne.s32.totalorder %s73, %s76
      %p82 = scmp.eq.s32.totalorder %s25, 0
      %p83 = por %p81, %p82
      %p84 = scmp.ne.s32.totalorder %s73, %s76
      %p85 = scmp.eq.s32.totalorder %s30, 7
      %p86 = por %p84, %p85
      %p87 = scmp.ne.s32.totalorder %s76, %s77
      %p88 = scmp.eq.s32.totalorder %s30, 0
      %p89 = por %p87, %p88
      %p90 = scmp.ne.s32.totalorder %s76, %s77
      %p91 = scmp.eq.s32.totalorder %s31, 7
      %p92 = por %p90, %p91
      %p94 = scmp.ne.s32.totalorder %s77, %s93
      %p95 = scmp.eq.s32.totalorder %s31, 0
      %p96 = por %p94, %p95
      %s97 = ssub.s32 %s33, %s40
      %p98 = scmp.eq.s32.totalorder %s97, 0
      %s100 = sadd.s32 %s99, 1
      %s101 = scalar_select %p98, %s99, %s100
      %p104 = pneg %p98
      %p105 = scmp.eq.s32.totalorder %s25, 7
      %p106 = por %p104, %p105
      %p107 = scmp.ne.s32.totalorder %s99, %s102
      %p108 = scmp.eq.s32.totalorder %s25, 0
      %p109 = por %p107, %p108
      %p110 = scmp.ne.s32.totalorder %s99, %s102
      %p111 = scmp.eq.s32.totalorder %s30, 7
      %p112 = por %p110, %p111
      %p113 = scmp.ne.s32.totalorder %s102, %s103
      %p114 = scmp.eq.s32.totalorder %s30, 0
      %p115 = por %p113, %p114
      %p116 = scmp.ne.s32.totalorder %s102, %s103
      %p117 = scmp.eq.s32.totalorder %s31, 7
      %p118 = por %p116, %p117
      %p120 = scmp.ne.s32.totalorder %s103, %s119
      %p121 = scmp.eq.s32.totalorder %s31, 0
      %p122 = por %p120, %p121
      %s123 = ssub.s32 %s32, %s44
      %p124 = scmp.eq.s32.totalorder %s123, 0
      %s126 = sadd.s32 %s125, 1
      %s127 = scalar_select %p124, %s125, %s126
      %p130 = pneg %p124
      %p131 = scmp.eq.s32.totalorder %s25, 7
      %p132 = por %p130, %p131
      %p133 = scmp.ne.s32.totalorder %s125, %s128
      %p134 = scmp.eq.s32.totalorder %s25, 0
      %p135 = por %p133, %p134
      %p136 = scmp.ne.s32.totalorder %s125, %s128
      %p137 = scmp.eq.s32.totalorder %s30, 7
      %p138 = por %p136, %p137
      %p139 = scmp.ne.s32.totalorder %s128, %s129
      %p140 = scmp.eq.s32.totalorder %s30, 0
      %p141 = por %p139, %p140
      %p142 = scmp.ne.s32.totalorder %s128, %s129
      %p143 = scmp.eq.s32.totalorder %s31, 7
      %p144 = por %p142, %p143
      %p146 = scmp.ne.s32.totalorder %s129, %s145
      %p147 = scmp.eq.s32.totalorder %s31, 0
      %p148 = por %p146, %p147
      %s149 = ssub.s32 %s32, %s44
      %p150 = scmp.eq.s32.totalorder %s149, 0
      %s152 = sadd.s32 %s151, 1
      %s153 = scalar_select %p150, %s151, %s152
      %p156 = pneg %p150
      %p157 = scmp.eq.s32.totalorder %s25, 7
      %p158 = por %p156, %p157
      %p159 = scmp.ne.s32.totalorder %s151, %s154
      %p160 = scmp.eq.s32.totalorder %s25, 0
      %p161 = por %p159, %p160
      %p162 = scmp.ne.s32.totalorder %s151, %s154
      %p163 = scmp.eq.s32.totalorder %s30, 7
      %p164 = por %p162, %p163
      %p165 = scmp.ne.s32.totalorder %s154, %s155
      %p166 = scmp.eq.s32.totalorder %s30, 0
      %p167 = por %p165, %p166
      %p168 = scmp.ne.s32.totalorder %s154, %s155
      %p169 = scmp.eq.s32.totalorder %s31, 7
      %p170 = por %p168, %p169
      %p172 = scmp.ne.s32.totalorder %s155, %s171
      %p173 = scmp.eq.s32.totalorder %s31, 0
      %p174 = por %p172, %p173
      %s175 = ssub.s32 %s32, %s44
      %p176 = scmp.eq.s32.totalorder %s175, 0
      %s178 = sadd.s32 %s177, 1
      %s179 = scalar_select %p176, %s177, %s178
      %p182 = pneg %p176
      %p183 = scmp.eq.s32.totalorder %s25, 7
      %p184 = por %p182, %p183
      %p185 = scmp.ne.s32.totalorder %s177, %s180
      %p186 = scmp.eq.s32.totalorder %s25, 0
      %p187 = por %p185, %p186
      %p188 = scmp.ne.s32.totalorder %s177, %s180
      %p189 = scmp.eq.s32.totalorder %s30, 7
      %p190 = por %p188, %p189
      %p191 = scmp.ne.s32.totalorder %s180, %s181
      %p192 = scmp.eq.s32.totalorder %s30, 0
      %p193 = por %p191, %p192
      %p194 = scmp.ne.s32.totalorder %s180, %s181
      %p195 = scmp.eq.s32.totalorder %s31, 7
      %p196 = por %p194, %p195
      %p198 = scmp.ne.s32.totalorder %s181, %s197
      %p199 = scmp.eq.s32.totalorder %s31, 0
      %p200 = por %p198, %p199
      %s201 = ssub.s32 %s32, %s44
      %s202 = ssub.s32 %s33, %s40
      %s203 = sor.u32 %s201, %s202
      %p204 = scmp.eq.s32.totalorder %s203, 0
      %s206 = sadd.s32 %s205, 1
      %s207 = scalar_select %p204, %s205, %s206
      %p210 = pneg %p204
      %p211 = scmp.eq.s32.totalorder %s25, 7
      %p212 = por %p210, %p211
      %p213 = scmp.ne.s32.totalorder %s205, %s208
      %p214 = scmp.eq.s32.totalorder %s25, 0
      %p215 = por %p213, %p214
      %p216 = scmp.ne.s32.totalorder %s205, %s208
      %p217 = scmp.eq.s32.totalorder %s30, 7
      %p218 = por %p216, %p217
      %p219 = scmp.ne.s32.totalorder %s208, %s209
      %p220 = scmp.eq.s32.totalorder %s30, 0
      %p221 = por %p219, %p220
      %p222 = scmp.ne.s32.totalorder %s208, %s209
      %p223 = scmp.eq.s32.totalorder %s31, 7
      %p224 = por %p222, %p223
      %p226 = scmp.ne.s32.totalorder %s209, %s225
      %p227 = scmp.eq.s32.totalorder %s31, 0
      %p228 = por %p226, %p227
      %p229 = scmp.le.s32.totalorder 1, %s25
      %p230 = scmp.lt.s32.totalorder %s25, 9
      %p231 = pnand %p229, %p230
      %p232 = pneg %p231
      // Predicated region
      $region9: #{tpu_custom_call.1} parent=5 // pred_check
        _
      $region10: #{tpu_custom_call.1} parent=5 // pred_check_branch
        %234 = sbr.rel (%p231) target = $region12
      $region11: #{tpu_custom_call.1} parent=5 // pred_region
        %s235 = ssub.s32 %s25, 1
      $region12: #{tpu_custom_call.1} parent=5 // pred_fallthru
        _
      %p236 = scmp.lt.s32.totalorder %s25, 8
      // Predicated region
      $region13: #{tpu_custom_call.1} parent=5 // pred_check
        %p237 = pneg %p236
      $region14: #{tpu_custom_call.1} parent=5 // pred_check_branch
        %239 = sbr.rel (%p237) target = $region16
      $region15: #{tpu_custom_call.1} parent=5 // pred_region
        // Predicated region
        $region17: #{tpu_custom_call.1} parent=15 // pred_check
          %p240 = pneg %p57
        $region18: #{tpu_custom_call.1} parent=15 // pred_check_branch
          %242 = sbr.rel (%p240) target = $region20
        $region19: #{tpu_custom_call.1} parent=15 // pred_region
          %p243 = scmp.lt.s32.totalorder %s32, 1
          %s244 = scalar_select %p243, %s32, 1
          %s245 = smul.addr %s244, 8
          %s246 = scalar_lea.vmem %s1, %s245
        $region20: #{tpu_custom_call.1} parent=15 // pred_fallthru
          _
        // Predicated region
        $region21: #{tpu_custom_call.1} parent=15 // pred_check
          %p247 = pneg %p83
        $region22: #{tpu_custom_call.1} parent=15 // pred_check_branch
          %249 = sbr.rel (%p247) target = $region24
        $region23: #{tpu_custom_call.1} parent=15 // pred_region
          %s250 = sand.u32 %s73, 1
          %s251 = scalar_lea.sflag [#allocation5], %s250
          %s252 = sand.u32 %s73, 1
          %s253 = smul.addr %s252, 128
          %s254 = scalar_lea.vmem [#allocation4], %s253
          %s255 = smul.u32 2, %s33
          %s257 = ssub.s32 2048, 2048
          %258 = vsyncadd %s251, %s257
          %s259 = smul.addr %s255, 128
          %s260 = scalar_lea.hbm %s2, %s259
          %s261 = sshll.u32 %s254, 4
          %s262 = int_to_ptr.vmem [resolvable:$true] %s261
          %267 = dma.hbm_to_vmem [thread:$0]  %s260, 2048, %s262, %s251, 1024, 256, 16
        $region24: #{tpu_custom_call.1} parent=15 // pred_fallthru
          _
        // Predicated region
        $region25: #{tpu_custom_call.1} parent=15 // pred_check
          %p268 = pneg %p109
        $region26: #{tpu_custom_call.1} parent=15 // pred_check_branch
          %270 = sbr.rel (%p268) target = $region28
        $region27: #{tpu_custom_call.1} parent=15 // pred_region
          %s271 = smul.u32 2, %s33
          %p272 = scmp.lt.s32.totalorder %s271, 7
          %s273 = scalar_select %p272, %s271, 7
          %s274 = scalar_lea.vmem %s3, %s273
          %s275 = smul.u32 2, %s33
        $region28: #{tpu_custom_call.1} parent=15 // pred_fallthru
          _
        // Predicated region
        $region29: #{tpu_custom_call.1} parent=15 // pred_check
          %p276 = pneg %p135
        $region30: #{tpu_custom_call.1} parent=15 // pred_check_branch
          %278 = sbr.rel (%p276) target = $region32
        $region31: #{tpu_custom_call.1} parent=15 // pred_region
          %p279 = scmp.lt.s32.totalorder %s32, 1
          %s280 = scalar_select %p279, %s32, 1
          %s281 = smul.addr %s280, 8
          %s282 = scalar_lea.vmem %s4, %s281
        $region32: #{tpu_custom_call.1} parent=15 // pred_fallthru
          _
        // Predicated region
        $region33: #{tpu_custom_call.1} parent=15 // pred_check
          %p283 = pneg %p161
        $region34: #{tpu_custom_call.1} parent=15 // pred_check_branch
          %285 = sbr.rel (%p283) target = $region36
        $region35: #{tpu_custom_call.1} parent=15 // pred_region
          %p286 = scmp.lt.s32.totalorder %s32, 1
          %s287 = scalar_select %p286, %s32, 1
          %s288 = smul.addr %s287, 8
          %s289 = scalar_lea.vmem %s5, %s288
        $region36: #{tpu_custom_call.1} parent=15 // pred_fallthru
          _
        // Predicated region
        $region37: #{tpu_custom_call.1} parent=15 // pred_check
          %p290 = pneg %p187
        $region38: #{tpu_custom_call.1} parent=15 // pred_check_branch
          %292 = sbr.rel (%p290) target = $region40
        $region39: #{tpu_custom_call.1} parent=15 // pred_region
          %p293 = scmp.lt.s32.totalorder %s32, 1
          %s294 = scalar_select %p293, %s32, 1
          %s295 = smul.addr %s294, 8
          %s296 = scalar_lea.vmem %s6, %s295
        $region40: #{tpu_custom_call.1} parent=15 // pred_fallthru
          _
      $region16: #{tpu_custom_call.1} parent=5 // pred_fallthru
        _
      %p297 = scmp.le.s32.totalorder 1, %s25
      %p298 = scmp.lt.s32.totalorder %s25, 9
      %p299 = pnand %p297, %p298
      %p300 = pneg %p299
      // Predicated region
      $region41: #{tpu_custom_call.1} parent=5 // pred_check
        _
      $region42: #{tpu_custom_call.1} parent=5 // pred_check_branch
        %302 = sbr.rel (%p299) target = $region44
      $region43: #{tpu_custom_call.1} parent=5 // pred_region
        %s303 = ssub.s32 %s25, 1
        %s304 = sand.u32 %s76, 1
        %s305 = scalar_lea.sflag [#allocation5], %s304
        %s306 = sand.u32 %s76, 1
        %s307 = smul.addr %s306, 128
        %s308 = scalar_lea.vmem [#allocation4], %s307
        // Predicated region
        $region45: #{tpu_custom_call.1} parent=43 // pred_check
          %p309 = pneg %p89
        $region46: #{tpu_custom_call.1} parent=43 // pred_check_branch
          %311 = sbr.rel (%p309) target = $region48
        $region47: #{tpu_custom_call.1} parent=43 // pred_region
          %312 = dma.done %s305, 2048
        $region48: #{tpu_custom_call.1} parent=43 // pred_fallthru
          _
        %p313 = scmp.lt.s32.totalorder %s34, 1
        %s314 = scalar_select %p313, %s34, 1
        %s315 = smul.addr %s314, 8
        %s316 = scalar_lea.vmem %s1, %s315
        %p317 = pneg %p63
        %p318 = pneg %p60
        %s319 = sand.u32 %s76, 1
        %s320 = scalar_lea.sflag [#allocation5], %s319
        %s321 = sand.u32 %s76, 1
        %s322 = smul.addr %s321, 128
        %s323 = scalar_lea.vmem [#allocation4], %s322
        %p324 = pneg %p89
        %p325 = pneg %p86
        %s326 = smul.u32 2, %s35
        %p327 = scmp.lt.s32.totalorder %s326, 7
        %s328 = scalar_select %p327, %s326, 7
        %s329 = scalar_lea.vmem %s3, %s328
        %p330 = pneg %p115
        %p331 = pneg %p112
        %p332 = scmp.lt.s32.totalorder %s34, 1
        %s333 = scalar_select %p332, %s34, 1
        %s334 = smul.addr %s333, 8
        %s335 = scalar_lea.vmem %s4, %s334
        %p336 = pneg %p141
        %p337 = pneg %p138
        %p338 = scmp.lt.s32.totalorder %s34, 1
        %s339 = scalar_select %p338, %s34, 1
        %s340 = smul.addr %s339, 8
        %s341 = scalar_lea.vmem %s5, %s340
        %p342 = pneg %p167
        %p343 = pneg %p164
        %p344 = scmp.lt.s32.totalorder %s34, 1
        %s345 = scalar_select %p344, %s34, 1
        %s346 = smul.addr %s345, 8
        %s347 = scalar_lea.vmem %s6, %s346
        %p348 = pneg %p193
        %p349 = pneg %p190
        %p350 = pneg %p221
        %p351 = pneg %p218
        %s352 = sand.u32 %s208, 1
        %s353 = scalar_lea.sflag [#allocation6], %s352
        %s354 = sand.u32 %s208, 1
        %s355 = smul.addr %s354, 16
        %s356 = scalar_lea.vmem [#allocation7], %s355
        %p357 = scmp.lt.s32.totalorder %s34, 1
        %s358 = scalar_select %p357, %s34, 1
        %s359 = smul.addr %s358, 8
        %s360 = scalar_lea.vmem %s1, %s359
        %s361 = smul.u32 2, %s35
        %s362 = smul.u32 2, %s35
        %p363 = scmp.lt.s32.totalorder %s362, 7
        %s364 = scalar_select %p363, %s362, 7
        %s365 = scalar_lea.vmem %s3, %s364
        %s366 = smul.u32 2, %s35
        %p367 = scmp.lt.s32.totalorder %s34, 1
        %s368 = scalar_select %p367, %s34, 1
        %s369 = smul.addr %s368, 8
        %s370 = scalar_lea.vmem %s4, %s369
        %p371 = scmp.lt.s32.totalorder %s34, 1
        %s372 = scalar_select %p371, %s34, 1
        %s373 = smul.addr %s372, 8
        %s374 = scalar_lea.vmem %s5, %s373
        %p375 = scmp.lt.s32.totalorder %s34, 1
        %s376 = scalar_select %p375, %s34, 1
        %s377 = smul.addr %s376, 8
        %s378 = scalar_lea.vmem %s6, %s377
        %s379 = smul.u32 2, %s35
        %v380 = vld [vmem:[%s360] sm:$0xff]
        %v381 = vmul.f32 %v380, %v380
        %vm382 = vcmask 523264
        %v383 = vsel %vm382, %v381, 0.0
        %384 = vadd.xlane.f32.xlu0 %v383
        %v385 = vpop.xlane.xlu0 %384
        %v386 = vadd.f32 %v385, 1e-12
        %v387 = vrsqrt.pop %v386
        %v388 = vld [vmem:[%s308] sm:$0xff]
        %v389 = vld [vmem:[%s308 + $0x8] sm:$0xff]
        %v390 = vld [vmem:[%s308 + $0x10] sm:$0xff]
        %v391 = vld [vmem:[%s308 + $0x18] sm:$0xff]
        %v392 = vld [vmem:[%s308 + $0x20] sm:$0xff]
        %v393 = vld [vmem:[%s308 + $0x28] sm:$0xff]
        %v394 = vld [vmem:[%s308 + $0x30] sm:$0xff]
        %v395 = vld [vmem:[%s308 + $0x38] sm:$0xff]
        %v396 = vld [vmem:[%s308 + $0x40] sm:$0xff]
        %v397 = vld [vmem:[%s308 + $0x48] sm:$0xff]
        %v398 = vld [vmem:[%s308 + $0x50] sm:$0xff]
        %v399 = vld [vmem:[%s308 + $0x58] sm:$0xff]
        %v400 = vld [vmem:[%s308 + $0x60] sm:$0xff]
        %v401 = vld [vmem:[%s308 + $0x68] sm:$0xff]
        %v402 = vld [vmem:[%s308 + $0x70] sm:$0xff]
        %v403 = vld [vmem:[%s308 + $0x78] sm:$0xff]
        %v405 = vsel %vm382, %v380, 0
        %407 = vmatprep.subr.mxu0 %v389
        %408 = vmatpush1.msra.mxu0 %v388
        %409 = vmatprep.subr.mxu0 %v391
        %410 = vmatpush1.msra.mxu0 %v390
        %411 = vmatprep.subr.mxu0 %v393
        %412 = vmatpush1.msra.mxu0 %v392
        %413 = vmatprep.subr.mxu0 %v395
        %414 = vmatpush1.msra.mxu0 %v394
        %415 = vmatprep.subr.mxu0 %v397
        %416 = vmatpush1.msra.mxu0 %v396
        %417 = vmatprep.subr.mxu0 %v399
        %418 = vmatpush1.msra.mxu0 %v398
        %419 = vmatprep.subr.mxu0 %v401
        %420 = vmatpush1.msra.mxu0 %v400
        %421 = vmatprep.subr.mxu0 %v403
        %422 = vmatpush1.msra.mxu0 %v402
        %423 = vmatprep.subr.mxu0 0.0
        %424 = vmatpush1.msra.mxu0 0.0
        %425 = vmatprep.subr.mxu0 0.0
        %426 = vmatpush1.msra.mxu0 0.0
        %427 = vmatprep.subr.mxu0 0.0
        %428 = vmatpush1.msra.mxu0 0.0
        %429 = vmatprep.subr.mxu0 0.0
        %430 = vmatpush1.msra.mxu0 0.0
        %431 = vmatprep.subr.mxu0 0.0
        %432 = vmatpush1.msra.mxu0 0.0
        %433 = vmatprep.subr.mxu0 0.0
        %434 = vmatpush1.msra.mxu0 0.0
        %435 = vmatprep.subr.mxu0 0.0
        %436 = vmatpush1.msra.mxu0 0.0
        %437 = vmatprep.subr.mxu0 0.0
        %438 = vmatpush1.msra.mxu0 0.0
        %439 = vmatprep.subr.mxu0 0.0
        %440 = vmatpush1.msra.mxu0 0.0
        %441 = vmatprep.subr.mxu0 0.0
        %442 = vmatpush1.msra.mxu0 0.0
        %443 = vmatprep.subr.mxu0 0.0
        %444 = vmatpush1.msra.mxu0 0.0
        %445 = vmatprep.subr.mxu0 0.0
        %446 = vmatpush1.msra.mxu0 0.0
        %447 = vmatprep.subr.mxu0 0.0
        %448 = vmatpush1.msra.mxu0 0.0
        %449 = vmatprep.subr.mxu0 0.0
        %450 = vmatpush1.msra.mxu0 0.0
        %451 = vmatprep.subr.mxu0 0.0
        %452 = vmatpush1.msra.mxu0 0.0
        %453 = vmatprep.subr.mxu0 0.0
        %454 = vmatpush1.msra.mxu0 0.0
        %455 = vmatprep.subr.mxu0 0.0
        %456 = vmatpush1.msra.mxu0 0.0
        %457 = vmatprep.subr.mxu0 0.0
        %458 = vmatpush1.msra.mxu0 0.0
        %459 = vmatprep.subr.mxu0 0.0
        %460 = vmatpush1.msra.mxu0 0.0
        %461 = vmatprep.subr.mxu0 0.0
        %462 = vmatpush1.msra.mxu0 0.0
        %463 = vmatprep.subr.mxu0 0.0
        %464 = vmatpush1.msra.mxu0 0.0
        %465 = vmatprep.subr.mxu0 0.0
        %466 = vmatpush1.msra.mxu0 0.0
        %467 = vmatprep.subr.mxu0 0.0
        %468 = vmatpush1.msra.mxu0 0.0
        %469 = vmatprep.subr.mxu0 0.0
        %470 = vmatpush1.msra.mxu0 0.0
        %471 = vmatprep.mubr.f32.mxu0 0.0
        %472 = vmatmul.mubr.f32.gmra.mrb[0].mxu0 %v405
        %v473 = vpop.f32.mrb[0].mxu0
        %v474 = vadd.f32 0.0, %v473
        %v475 = vpop.f32.mrb[0].mxu0
        %v476 = vadd.f32 0.0, %v475
        %477 = vdwg.mxu0
        %v478 = vmul.f32 %v474, %v387
        %v479 = vmul.f32 %v476, %v387
        %v480 = vld [vmem:[%s365] sm:$0x3]
        %v482 = vlaneseq
        %v483 = vshrl.u32 %v482, 7
        %v484 = vsub.s32 0, %v483
        %v485 = vrot.slane %v480, %v484
        %v486 = vlaneseq
        %v487 = vshrl.u32 %v486, 7
        %v488 = vsub.s32 1, %v487
        %v489 = vrot.slane %v480, %v488
        %v492 = vmul.f32 %v478, %v485
        %v493 = vmul.f32 %v479, %v489
        %v494 = vmax.f32 %v492, -64.0
        %v495 = vmax.f32 %v493, -64.0
        %v496 = vmin.f32 %v494, 64.0
        %v497 = vmin.f32 %v495, 64.0
        %s498 = sshra.s32 %s35, 7
        %s499 = sand.u32 %s35, 127
        %s500 = sadd.s32 %s498, %s34
        %s501 = smul.u32 %s500, 128
        %s502 = sshra.s32 %s35, 7
        %s503 = sand.u32 %s35, 127
        %s504 = sadd.s32 %s501, %s503
        %s505 = sld [smem:[#allocation3 + %s504]]
        %p506 = scmp.gt.s32.totalorder %s505, 0
        // Predicated region
        $region49: #{tpu_custom_call.1} parent=43 // pred_check
          %p507 = pneg %p506
        $region50: #{tpu_custom_call.1} parent=43 // pred_check_branch
          %509 = sbr.rel (%p507) target = $region52
        $region51: #{tpu_custom_call.1} parent=43 // pred_region
          %v510 = vld [vmem:[%s370] sm:$0xff]
          %s511 = smul.u32 %s35, 256
          %v512 = vlaneseq
          %v513 = vand.u32 %v512, 127
          %v514 = vadd.s32 %v513, 128
          %v515 = vstv %s511
          %v516 = vadd.s32 %v515, %v513
          %v517 = vadd.s32 %v515, %v514
          %518 = vset.pattern.permute.xlu0 0
          %519 = vperm.xlu0 %518, %v510
          %v520 = vpop.permute.xlu0 %519
          %vm521 = vcmp.eq.s32.totalorder %v516, %v520
          %vm522 = vcmp.eq.s32.totalorder %v517, %v520
          %vm523 = vcmp.ne.s32.totalorder %v510, 4294967295
          %v524 = vsel %vm523, 1, 0
          %525 = vset.pattern.permute.xlu0 0
          %526 = vperm.xlu0 %525, %v524
          %v527 = vpop.permute.xlu0 %526
          %vm528 = vcmp.eq.s32.totalorder %v527, 1
          %vm529 = vmand %vm521, %vm528
          %vm530 = vmand %vm522, %vm528
          %v531 = vmul.f32 %v496, 0.015625
          %v532 = vmul.f32 %v497, 0.015625
          %v533 = vmul.f32 %v531, %v531
          %v534 = vmul.f32 %v532, %v532
          %v535 = vsub.f32 1.0, %v533
          %v536 = vsub.f32 1.0, %v534
          %v537 = vmax.f32 %v535, 0.0
          %v538 = vmax.f32 %v536, 0.0
          %v539 = vrsqrt.pop %v537
          %v540 = vmul.f32 %v537, %v539
          %vm541 = vcmp.eq.f32.partialorder %v537, inf
          %v542 = vsel %vm541, %v537, %v540
          %vm543 = vcmp.eq.f32.partialorder %v537, 0.0
          %v544 = vand.u32 %v537, 2147483648
          %v545 = vsel %vm543, %v544, %v542
          %v546 = vrsqrt.pop %v538
          %v547 = vmul.f32 %v538, %v546
          %vm548 = vcmp.eq.f32.partialorder %v538, inf
          %v549 = vsel %vm548, %v538, %v547
          %vm550 = vcmp.eq.f32.partialorder %v538, 0.0
          %v551 = vand.u32 %v538, 2147483648
          %v552 = vsel %vm550, %v551, %v549
          %v553 = vld [vmem:[%s374] sm:$0xff]
          %555 = vset.pattern.permute.xlu0 0
          %556 = vperm.xlu0 %555, %v553
          %v557 = vpop.permute.xlu0 %556
          %v559 = vmul.f32 %v531, %v557
          %v560 = vmul.f32 %v532, %v557
          %v561 = vld [vmem:[%s378] sm:$0xff]
          %563 = vset.pattern.permute.xlu0 0
          %564 = vperm.xlu0 %563, %v561
          %v565 = vpop.permute.xlu0 %564
          %v567 = vmul.f32 %v545, %v565
          %v568 = vmul.f32 %v552, %v565
          %v569 = vsub.f32 %v559, %v567
          %v570 = vsub.f32 %v560, %v568
          %v571 = vsel %vm529, %v569, %v496
          %v572 = vsel %vm530, %v570, %v497
          %573 = vst [vmem:[%s356] sm:$0xff] %v571
          %574 = vst [vmem:[%s356 + $0x8] sm:$0xff] %v572
        $region52: #{tpu_custom_call.1} parent=43 // pred_fallthru
          _
        %s575 = sld [smem:[#allocation3 + %s504]]
        %p576 = scmp.eq.s32.totalorder %s575, 0
        // Predicated region
        $region53: #{tpu_custom_call.1} parent=43 // pred_check
          %p577 = pneg %p576
        $region54: #{tpu_custom_call.1} parent=43 // pred_check_branch
          %579 = sbr.rel (%p577) target = $region56
        $region55: #{tpu_custom_call.1} parent=43 // pred_region
          %580 = vst [vmem:[%s356] sm:$0xff] %v496
          %581 = vst [vmem:[%s356 + $0x8] sm:$0xff] %v497
        $region56: #{tpu_custom_call.1} parent=43 // pred_fallthru
          _
        %s582 = sand.u32 %s208, 1
        %s583 = scalar_lea.sflag [#allocation6], %s582
        %s584 = sand.u32 %s208, 1
        %s585 = smul.addr %s584, 16
        %s586 = scalar_lea.vmem [#allocation7], %s585
        // Predicated region
        $region57: #{tpu_custom_call.1} parent=43 // pred_check
          %p587 = pneg %p218
        $region58: #{tpu_custom_call.1} parent=43 // pred_check_branch
          %589 = sbr.rel (%p587) target = $region60
        $region59: #{tpu_custom_call.1} parent=43 // pred_region
          %s590 = smul.u32 2, %s35
          %s592 = ssub.s32 256, 256
          %593 = vsyncadd %s583, %s592
          %s594 = smul.addr %s34, 8
          %s595 = sadd.s32 %s590, %s594
          %s596 = smul.addr %s595, 128
          %s597 = scalar_lea.hbm %s7, %s596
          %s599 = sshll.u32 %s586, 4
          %s600 = int_to_ptr.vmem [resolvable:$true] %s599
          %602 = dma.vmem_to_hbm [thread:$0]  %s600, 256, %s597, %s583
        $region60: #{tpu_custom_call.1} parent=43 // pred_fallthru
          _
      $region44: #{tpu_custom_call.1} parent=5 // pred_fallthru
        _
      %p603 = scmp.le.s32.totalorder 2, %s25
      // Predicated region
      $region61: #{tpu_custom_call.1} parent=5 // pred_check
        %p604 = pneg %p603
      $region62: #{tpu_custom_call.1} parent=5 // pred_check_branch
        %606 = sbr.rel (%p604) target = $region64
      $region63: #{tpu_custom_call.1} parent=5 // pred_region
        %s607 = ssub.s32 %s25, 2
        // Predicated region
        $region65: #{tpu_custom_call.1} parent=63 // pred_check
          %p608 = pneg %p224
        $region66: #{tpu_custom_call.1} parent=63 // pred_check_branch
          %610 = sbr.rel (%p608) target = $region68
        $region67: #{tpu_custom_call.1} parent=63 // pred_region
          %s611 = sand.u32 %s209, 1
          %s612 = scalar_lea.sflag [#allocation6], %s611
          %s613 = sand.u32 %s209, 1
          %s614 = smul.addr %s613, 16
          %s615 = scalar_lea.vmem [#allocation7], %s614
          %616 = dma.done %s612, 256
        $region68: #{tpu_custom_call.1} parent=63 // pred_fallthru
          _
      $region64: #{tpu_custom_call.1} parent=5 // pred_fallthru
        _
    $region6: #{tpu_custom_call.1} parent=1 // loop_footer
      %s29 = sadd.s32 1, %s25
    $region7: #{tpu_custom_call.1} parent=1 // loop_footer_branch
      %24 = sbr.rel target = $region3
    $region8: #{tpu_custom_call.1} parent=1 // loop_exit
      _
    %617 = vsyncpa [#allocation5], 1
    %s618 = scalar_lea.sflag [#allocation5], 1
    %619 = vsyncpa %s618, 1
    %620 = vsyncpa [#allocation6], 1
    %s621 = scalar_lea.sflag [#allocation6], 1
    %622 = vsyncpa %s621, 1

</llo_original>
